<compile_context>
chip_gen: v6e
topology: v6e:2x2x1
jax: 0.10.0
libtpu: 0.0.40
codegen_flags: <defaults>
</compile_context>

<pallas_src>
import math

import jax
import jax.numpy as jnp
from jax.experimental import pallas as pl
from jax.experimental.pallas import tpu as pltpu


def _round_up(x, m):
    return ((x + m - 1) // m) * m


def _patch_proj_kernel(p_ref, w_ref, b_ref, o_ref):
    # p_ref: (TM, K)  patches tile          (f32 or bf16)
    # w_ref: (K, TE)  transposed conv weight (f32 or bf16)
    # b_ref: (1, TE)  bias (f32)
    # o_ref: (TM, TE) output tile (f32)
    acc = jnp.dot(p_ref[...], w_ref[...], preferred_element_type=jnp.float32)
    o_ref[...] = (acc + b_ref[...]).astype(o_ref.dtype)


def _patch_proj(patches, w_t, bias, *, out_dtype=jnp.float32):
    """Tiled (M, K) @ (K, E_pad) + bias on the MXU.

    `w_t` / `bias` must already be padded so E_pad is a multiple of 128
    (lane-dense output stores).  K is kept un-tiled (it is C*ph*pw, small).
    """
    M, K = patches.shape
    K2, E_pad = w_t.shape
    assert K == K2 and E_pad % 128 == 0 and bias.shape == (1, E_pad)

    # --- tile sizes ------------------------------------------------------
    # TM = 512 keeps 2x double-buffered input/output tiles + the resident
    # weight well under VMEM on v5e/v6e (128 MiB) *and* v7x (64 MiB), while
    # amortizing the ~0.35 us per-step overhead.  Multiple of 16 (bf16 rows).
    TM = min(512, _round_up(M, 16))
    M_pad = _round_up(M, TM)
    # TE: largest multiple of 128 that divides E_pad, capped at 1024 so the
    # weight/output tiles stay small even for very large embed dims.
    TE = min(E_pad, 1024)
    while E_pad % TE:
        TE -= 128

    if M_pad != M:
        patches = jnp.pad(patches, ((0, M_pad - M), (0, 0)))

    grid = (M_pad // TM, E_pad // TE)

    in_bytes = jnp.dtype(patches.dtype).itemsize
    # Double-buffered patches/out tiles + weight + bias, with 2x headroom;
    # capped below v7x's 64 MiB physical VMEM.
    vmem_need = 2 * (TM * K * in_bytes + K * TE * in_bytes
                     + TE * 4 + TM * TE * 4)
    vmem_limit = int(min(48 * 1024 * 1024,
                         max(32 * 1024 * 1024, 2 * vmem_need)))

    cost = pl.CostEstimate(
        flops=2 * M_pad * K * E_pad,
        transcendentals=0,
        bytes_accessed=(M_pad * K * in_bytes
                        + grid[0] * K * E_pad * in_bytes
                        + M_pad * E_pad * 4),
    )

    out = pl.pallas_call(
        _patch_proj_kernel,
        out_shape=jax.ShapeDtypeStruct((M_pad, E_pad), out_dtype),
        grid_spec=pltpu.PrefetchScalarGridSpec(
            num_scalar_prefetch=0,
            grid=grid,
            in_specs=[
                pl.BlockSpec((TM, K), lambda i, j: (i, 0)),   # patches tile
                pl.BlockSpec((K, TE), lambda i, j: (0, j)),   # weight (resident when 1 E tile)
                pl.BlockSpec((1, TE), lambda i, j: (0, j)),   # bias
            ],
            out_specs=pl.BlockSpec((TM, TE), lambda i, j: (i, j)),
        ),
        compiler_params=pltpu.CompilerParams(
            dimension_semantics=("parallel", "parallel"),
            vmem_limit_bytes=vmem_limit,
        ),
        cost_estimate=cost,
    )(patches, w_t, bias)

    return out[:M]


class PatchEmbedPallas:
    """JAX/Pallas port of PatchEmbed (norm_layer=None, flatten=True)."""

    def __init__(self, img_size=16, patch_size=4, in_chans=4, embed_dim=32,
                 patch_stride=4, compute_dtype=jnp.float32, key=None):
        self.img_size = (img_size, img_size)
        self.patch_size = (patch_size, patch_size)
        self.patch_stride = (patch_stride, patch_stride)
        assert patch_size == patch_stride, (
            "kernel implements the non-overlapping case (patch_size == stride,"
            " padding == 0), the PyTorch default configuration")
        self.grid_size = (img_size // patch_stride, img_size // patch_stride)
        self.num_patches = self.grid_size[0] * self.grid_size[1]
        self.in_chans = in_chans
        self.embed_dim = embed_dim
        self.compute_dtype = compute_dtype

        if key is None:
            key = jax.random.PRNGKey(0)
        kw, kb = jax.random.split(key)
        # Conv2d weight: (embed_dim, in_chans, ph, pw); PyTorch-style init.
        fan_in = in_chans * patch_size * patch_size
        bound = 1.0 / math.sqrt(fan_in)
        self.weight = jax.random.uniform(
            kw, (embed_dim, in_chans, patch_size, patch_size),
            minval=-bound, maxval=bound, dtype=jnp.float32)
        self.bias = jax.random.uniform(
            kb, (embed_dim,), minval=-bound, maxval=bound, dtype=jnp.float32)

        # Precompute kernel operands once: flatten conv weight in (C, ph, pw)
        # order, transpose to (K, E), and pad the embed axis to a multiple of
        # 128 for lane-dense MXU output tiles.  Bias stays f32 (added to the
        # f32 accumulator).
        K = fan_in
        self._e_pad = _round_up(embed_dim, 128)
        w_t = self.weight.reshape(embed_dim, K).T                        # (K, E)
        w_t = jnp.pad(w_t, ((0, 0), (0, self._e_pad - embed_dim)))
        self._w_t = w_t.astype(compute_dtype)                            # (K, E_pad)
        self._bias = jnp.pad(self.bias, (0, self._e_pad - embed_dim)
                             ).reshape(1, self._e_pad).astype(jnp.float32)

    def __call__(self, x):
        B, C, H, W = x.shape
        assert H == self.img_size[0] and W == self.img_size[1]
        ph, pw = self.patch_size
        gh, gw = self.grid_size

        # Patchify glue (JAX-side): (B, C, H, W) -> (B*gh*gw, C*ph*pw).
        # The projection matmul (the hot path) runs inside the Pallas kernel.
        patches = x.reshape(B, C, gh, ph, gw, pw)
        patches = jnp.transpose(patches, (0, 2, 4, 1, 3, 5))  # B, gh, gw, C, ph, pw
        patches = patches.reshape(B * gh * gw, C * ph * pw)
        patches = patches.astype(self.compute_dtype)

        out = _patch_proj(patches, self._w_t, self._bias)      # (B*P, E_pad) f32
        out = out[:, :self.embed_dim]
        out = out.reshape(B, self.num_patches, self.embed_dim)
        # norm = Identity
        return out


def _reference(x, weight, bias, stride):
    # Pure-JAX reference conv for verification (f32).
    y = jax.lax.conv_general_dilated(
        x, weight, window_strides=(stride, stride), padding="VALID",
        dimension_numbers=("NCHW", "OIHW", "NCHW"))
    y = y + bias.reshape(1, -1, 1, 1)
    B, E, gh, gw = y.shape
    return y.reshape(B, E, gh * gw).transpose(0, 2, 1)


if __name__ == "__main__":
    key = jax.random.PRNGKey(0)
    k_x, k_p = jax.random.split(key)

    B, C, H = 2, 4, 16
    patch = 4
    embed_dim = 32

    x = jax.random.normal(k_x, (B, C, H, H), dtype=jnp.float32)

    # --- f32 path: exact check against a lax-conv reference ---------------
    mod_f32 = PatchEmbedPallas(img_size=H, patch_size=patch, in_chans=C,
                               embed_dim=embed_dim, patch_stride=patch,
                               compute_dtype=jnp.float32, key=k_p)
    out_f32 = jax.block_until_ready(mod_f32(x))
    ref = _reference(x, mod_f32.weight, mod_f32.bias, patch)
    assert out_f32.shape == (B, mod_f32.num_patches, embed_dim), out_f32.shape
    assert jnp.allclose(out_f32, ref, atol=1e-4, rtol=1e-4), float(
        jnp.max(jnp.abs(out_f32 - ref)))

    # --- bf16 path (recommended on v6e/v7x): check vs matching bf16 matmul -
    mod_bf16 = PatchEmbedPallas(img_size=H, patch_size=patch, in_chans=C,
                                embed_dim=embed_dim, patch_stride=patch,
                                compute_dtype=jnp.bfloat16, key=k_p)
    out_bf16 = jax.block_until_ready(mod_bf16(x))
    gh = gw = H // patch
    patches_ref = x.reshape(B, C, gh, patch, gw, patch)
    patches_ref = jnp.transpose(patches_ref, (0, 2, 4, 1, 3, 5))
    patches_ref = patches_ref.reshape(B * gh * gw, C * patch * patch)
    ref_bf16 = (jnp.dot(patches_ref.astype(jnp.bfloat16),
                        mod_bf16.weight.reshape(embed_dim, -1).T.astype(jnp.bfloat16),
                        preferred_element_type=jnp.float32)
                + mod_bf16.bias).reshape(B, gh * gw, embed_dim)
    assert out_bf16.shape == (B, mod_bf16.num_patches, embed_dim), out_bf16.shape
    assert jnp.allclose(out_bf16, ref_bf16, atol=1e-2, rtol=1e-2), float(
        jnp.max(jnp.abs(out_bf16 - ref_bf16)))

    print("KERNEL_OK")
</pallas_src>

<mosaic_0001>
module attributes {stable_mosaic.version = 11 : i64} {
  func.func @_patch_proj_kernel(%arg0: i32, %arg1: i32, %arg2: memref<32x64xf32, #tpu.memory_space<vmem>>, %arg3: memref<64x128xf32, #tpu.memory_space<vmem>>, %arg4: memref<1x128xf32, #tpu.memory_space<vmem>>, %arg5: memref<32x128xf32, #tpu.memory_space<vmem>>) attributes {dimension_semantics = [#tpu.dimension_semantics<parallel>, #tpu.dimension_semantics<parallel>], iteration_bounds = array<i64: 1, 1>, scalar_prefetch = 0 : i64, scratch_operands = 0 : i64, tpu.core_type = #tpu.core_type<tc>, window_params = [{transform_indices = @transform_0, window_bounds = array<i64: 32, 64>}, {transform_indices = @transform_1, window_bounds = array<i64: 64, 128>}, {transform_indices = @transform_2, window_bounds = array<i64: 1, 128>}, {transform_indices = @transform_3, window_bounds = array<i64: 32, 128>}]} {
    %c0 = arith.constant 0 : index
    %c0_0 = arith.constant 0 : index
    %0 = vector.load %arg2[%c0, %c0_0] : memref<32x64xf32, #tpu.memory_space<vmem>>, vector<32x64xf32>
    %c0_1 = arith.constant 0 : index
    %c0_2 = arith.constant 0 : index
    %1 = vector.load %arg3[%c0_1, %c0_2] : memref<64x128xf32, #tpu.memory_space<vmem>>, vector<64x128xf32>
    %cst = arith.constant dense<0.000000e+00> : vector<32x128xf32>
    %2 = tpu.matmul %0, %1, %cst {dimension_numbers = #tpu.dot_dimension_numbers<[1], [0], [0], [1], [0, 0, 1, 1], [], []>} : vector<32x64xf32>, vector<64x128xf32>, vector<32x128xf32> -> vector<32x128xf32>
    %c0_3 = arith.constant 0 : index
    %c0_4 = arith.constant 0 : index
    %3 = vector.load %arg4[%c0_3, %c0_4] : memref<1x128xf32, #tpu.memory_space<vmem>>, vector<1x128xf32>
    %4 = vector.broadcast %3 : vector<1x128xf32> to vector<32x128xf32>
    %5 = arith.addf %2, %4 : vector<32x128xf32>
    %c0_5 = arith.constant 0 : index
    %c0_6 = arith.constant 0 : index
    %6 = vector.load %arg5[%c0_5, %c0_6] : memref<32x128xf32, #tpu.memory_space<vmem>>, vector<32x128xf32>
    tpu.vector_store %arg5[%c0_5, %c0_6], %5 {strides = array<i32>} : memref<32x128xf32, #tpu.memory_space<vmem>>, vector<32x128xf32>,
    return
  }
  func.func @transform_0(%arg0: i32, %arg1: i32) -> (i32, i32) {
    %c0_i32 = arith.constant 0 : i32
    %c0_i32_0 = arith.constant 0 : i32
    return %arg0, %c0_i32 : i32, i32
  }
  func.func @transform_1(%arg0: i32, %arg1: i32) -> (i32, i32) {
    %c0_i32 = arith.constant 0 : i32
    %c0_i32_0 = arith.constant 0 : i32
    return %c0_i32, %arg1 : i32, i32
  }
  func.func @transform_2(%arg0: i32, %arg1: i32) -> (i32, i32) {
    %c0_i32 = arith.constant 0 : i32
    %c0_i32_0 = arith.constant 0 : i32
    return %c0_i32, %arg1 : i32, i32
  }
  func.func @transform_3(%arg0: i32, %arg1: i32) -> (i32, i32) {
    %c0_i32 = arith.constant 0 : i32
    return %arg0, %arg1 : i32, i32
  }
}

</mosaic_0001>

<llo_original>
// kernel: tpu_custom_call.1
$region0: #{tpu_custom_call.1}
  #allocation0 [shape = 'u32[]', space=smem, size = 0x4, offset = 0x4, fixed_abs, tag = 'smem constant byte address 0x4 - core index']
  #allocation1 [shape = 'u32[144,128]{1,0:T(1,128)}', space=vmem, size = 0x12000, scoped, tag = 'internal scratch']
  %s0 = inlined_call_operand.hbm [shape: f32[32,64], index: 0, kind: input, shape index: {}]
  %s1 = inlined_call_operand.hbm [shape: f32[64,128], index: 1, kind: input, shape index: {}]
  %s2 = inlined_call_operand.vmem [shape: f32[1,128], index: 2, kind: input, shape index: {}]
  %s3 = inlined_call_operand.hbm [shape: f32[32,128], index: 3, kind: output, shape index: {}]
  %s4 = sld [smem:[#allocation0]]
  $region30: #{tpu_custom_call.1} parent=0
    _
  %s6 = ssub.s32 1, %s4
  %s7 = scalar_select 0, %s6, %s4
  $region1: #{tpu_custom_call.1} parent=0
    #allocation2 [shape = 'u8[16384]{0}', space=vmem, size = 0x4000, scoped, tag = 'input window, operand 0, single buffered']
    #allocation3 [shape = 's32[1]{0}', space=sflag, size = 0x4, scoped, tag = 'scoped memory for tpu_custom_call.1']
    #allocation4 [shape = 's32[1]{0}', space=sflag, size = 0x4, scoped, tag = 'scoped memory for tpu_custom_call.1']
    #allocation5 [shape = 'u8[32768]{0}', space=vmem, size = 0x8000, scoped, tag = 'input window, operand 1, single buffered']
    #allocation6 [shape = 's32[1]{0}', space=sflag, size = 0x4, scoped, tag = 'scoped memory for tpu_custom_call.1']
    #allocation7 [shape = 'u8[16384]{0}', space=vmem, size = 0x4000, scoped, tag = 'output window, operand 0, single buffered']
    %8 = vsyncpa [#allocation3], 0
    %9 = vsyncpa [#allocation6], 0
    %10 = vsyncpa [#allocation4], 0
    // Predicated region
    $region2: #{tpu_custom_call.1} parent=1 // pred_check
      _
    $region3: #{tpu_custom_call.1} parent=1 // pred_check_branch
      %12 = sbr.rel (0) target = $region5
    $region4: #{tpu_custom_call.1} parent=1 // pred_region
      %s14 = ssub.s32 512, 512
      %15 = vsyncadd [#allocation3], %s14
      %s16 = sshll.u32 [#allocation2], 4
      %s17 = int_to_ptr.vmem [resolvable:$true] %s16
      %22 = dma.hbm_to_vmem [thread:$0]  %s0, 512, %s17, [#allocation3], 128, 128, 8
    $region5: #{tpu_custom_call.1} parent=1 // pred_fallthru
      _
    // Predicated region
    $region6: #{tpu_custom_call.1} parent=1 // pred_check
      _
    $region7: #{tpu_custom_call.1} parent=1 // pred_check_branch
      %24 = sbr.rel (0) target = $region9
    $region8: #{tpu_custom_call.1} parent=1 // pred_region
      %s26 = ssub.s32 1024, 1024
      %27 = vsyncadd [#allocation6], %s26
      %s28 = sshll.u32 [#allocation5], 4
      %s29 = int_to_ptr.vmem [resolvable:$true] %s28
      %34 = dma.hbm_to_vmem [thread:$0]  %s1, 1024, %s29, [#allocation6], 128, 128, 8
    $region9: #{tpu_custom_call.1} parent=1 // pred_fallthru
      _
    // Predicated region
    $region10: #{tpu_custom_call.1} parent=1 // pred_check
      _
    $region11: #{tpu_custom_call.1} parent=1 // pred_check_branch
      %36 = sbr.rel (0) target = $region13
    $region12: #{tpu_custom_call.1} parent=1 // pred_region
      _
    $region13: #{tpu_custom_call.1} parent=1 // pred_fallthru
      _
    // Predicated region
    $region14: #{tpu_custom_call.1} parent=1 // pred_check
      _
    $region15: #{tpu_custom_call.1} parent=1 // pred_check_branch
      %38 = sbr.rel (0) target = $region17
    $region16: #{tpu_custom_call.1} parent=1 // pred_region
      %39 = dma.done [#allocation3], 512
    $region17: #{tpu_custom_call.1} parent=1 // pred_fallthru
      _
    // Predicated region
    $region18: #{tpu_custom_call.1} parent=1 // pred_check
      _
    $region19: #{tpu_custom_call.1} parent=1 // pred_check_branch
      %41 = sbr.rel (0) target = $region21
    $region20: #{tpu_custom_call.1} parent=1 // pred_region
      %42 = dma.done [#allocation6], 1024
    $region21: #{tpu_custom_call.1} parent=1 // pred_fallthru
      _
    %v43 = vld [vmem:[#allocation2] sm:$0xff]
    %v44 = vld [vmem:[#allocation2 + $0x8] sm:$0xff]
    %v45 = vld [vmem:[#allocation2 + $0x10] sm:$0xff]
    %v46 = vld [vmem:[#allocation2 + $0x18] sm:$0xff]
    %v47 = vld [vmem:[#allocation5] sm:$0xff]
    %v48 = vld [vmem:[#allocation5 + $0x8] sm:$0xff]
    %v49 = vld [vmem:[#allocation5 + $0x10] sm:$0xff]
    %v50 = vld [vmem:[#allocation5 + $0x18] sm:$0xff]
    %v51 = vld [vmem:[#allocation5 + $0x20] sm:$0xff]
    %v52 = vld [vmem:[#allocation5 + $0x28] sm:$0xff]
    %v53 = vld [vmem:[#allocation5 + $0x30] sm:$0xff]
    %v54 = vld [vmem:[#allocation5 + $0x38] sm:$0xff]
    %v55 = vld [vmem:[%s2] sm:$0x1]
    %v57 = vlaneseq
    %v58 = vshrl.u32 %v57, 7
    %v59 = vsub.s32 0, %v58
    %v60 = vrot.slane %v55, %v59
    %vm62 = vcmask 523264
    %v64 = vsel %vm62, %v43, 0
    %v67 = vsel %vm62, %v44, 0
    %v70 = vsel %vm62, %v45, 0
    %v73 = vsel %vm62, %v46, 0
    %75 = vmatprep.subr.mxu0 0.0
    %76 = vmatpush1.msra.mxu0 0.0
    %77 = vmatprep.subr.mxu0 0.0
    %78 = vmatpush1.msra.mxu0 0.0
    %79 = vmatprep.subr.mxu0 0.0
    %80 = vmatpush1.msra.mxu0 0.0
    %81 = vmatprep.subr.mxu0 0.0
    %82 = vmatpush1.msra.mxu0 0.0
    %83 = vmatprep.subr.mxu0 0.0
    %84 = vmatpush1.msra.mxu0 0.0
    %85 = vmatprep.subr.mxu0 0.0
    %86 = vmatpush1.msra.mxu0 0.0
    %87 = vmatprep.subr.mxu0 0.0
    %88 = vmatpush1.msra.mxu0 0.0
    %89 = vmatprep.subr.mxu0 0.0
    %90 = vmatpush1.msra.mxu0 0.0
    %91 = vmatprep.subr.mxu0 0.0
    %92 = vmatpush1.msra.mxu0 %v54
    %93 = vmatprep.subr.mxu0 0.0
    %94 = vmatpush1.msra.mxu0 %v53
    %95 = vmatprep.subr.mxu0 0.0
    %96 = vmatpush1.msra.mxu0 %v52
    %97 = vmatprep.subr.mxu0 0.0
    %98 = vmatpush1.msra.mxu0 %v51
    %99 = vmatprep.subr.mxu0 0.0
    %100 = vmatpush1.msra.mxu0 %v50
    %101 = vmatprep.subr.mxu0 0.0
    %102 = vmatpush1.msra.mxu0 %v49
    %103 = vmatprep.subr.mxu0 0.0
    %104 = vmatpush1.msra.mxu0 %v48
    %105 = vmatprep.subr.mxu0 0.0
    %106 = vmatpush1.msra.mxu0 %v47
    %107 = vmatprep.subr.mxu0 0.0
    %108 = vmatpush2.msra.mxu0 0.0
    %109 = vmatprep.subr.mxu0 0.0
    %110 = vmatpush2.msra.mxu0 0.0
    %111 = vmatprep.subr.mxu0 0.0
    %112 = vmatpush2.msra.mxu0 0.0
    %113 = vmatprep.subr.mxu0 0.0
    %114 = vmatpush2.msra.mxu0 0.0
    %115 = vmatprep.subr.mxu0 0.0
    %116 = vmatpush2.msra.mxu0 0.0
    %117 = vmatprep.subr.mxu0 0.0
    %118 = vmatpush2.msra.mxu0 0.0
    %119 = vmatprep.subr.mxu0 0.0
    %120 = vmatpush2.msra.mxu0 0.0
    %121 = vmatprep.subr.mxu0 0.0
    %122 = vmatpush2.msra.mxu0 0.0
    %123 = vmatprep.subr.mxu0 0.0
    %124 = vmatpush2.msra.mxu0 0.0
    %125 = vmatprep.subr.mxu0 0.0
    %126 = vmatpush2.msra.mxu0 0.0
    %127 = vmatprep.subr.mxu0 0.0
    %128 = vmatpush2.msra.mxu0 0.0
    %129 = vmatprep.subr.mxu0 0.0
    %130 = vmatpush2.msra.mxu0 0.0
    %131 = vmatprep.subr.mxu0 0.0
    %132 = vmatpush2.msra.mxu0 0.0
    %133 = vmatprep.subr.mxu0 0.0
    %134 = vmatpush2.msra.mxu0 0.0
    %135 = vmatprep.subr.mxu0 0.0
    %136 = vmatpush2.msra.mxu0 0.0
    %137 = vmatprep.subr.mxu0 0.0
    %138 = vmatpush2.msra.mxu0 0.0
    %139 = vmatprep.mubr.f32.mxu0 0.0
    %140 = vmatmul.mubr.f32.gmra.mxu0 %v64
    %v141 = vpop.f32.mrf.mxu0
    %v142 = vadd.f32 %v60, %v141
    %v143 = vpop.f32.mrf.mxu0
    %144 = vmatprep.mubr.f32.mxu0 0.0
    %145 = vmatmul.mubr.f32.gmra.mxu0 %v67
    %v146 = vpop.f32.mrf.mxu0
    %v147 = vadd.f32 %v60, %v146
    %v148 = vpop.f32.mrf.mxu0
    %149 = vmatprep.mubr.f32.mxu0 0.0
    %150 = vmatmul.mubr.f32.gmra.mxu0 %v70
    %v151 = vpop.f32.mrf.mxu0
    %v152 = vadd.f32 %v60, %v151
    %v153 = vpop.f32.mrf.mxu0
    %154 = vmatprep.mubr.f32.mxu0 0.0
    %155 = vmatmul.mubr.f32.gmra.mxu0 %v73
    %v156 = vpop.f32.mrf.mxu0
    %v157 = vadd.f32 %v60, %v156
    %v158 = vpop.f32.mrf.mxu0
    %159 = vdwg.mxu0
    %160 = vst [vmem:[#allocation7] sm:$0xff] %v142
    %161 = vst [vmem:[#allocation7 + $0x8] sm:$0xff] %v147
    %162 = vst [vmem:[#allocation7 + $0x10] sm:$0xff] %v152
    %163 = vst [vmem:[#allocation7 + $0x18] sm:$0xff] %v157
    // Predicated region
    $region22: #{tpu_custom_call.1} parent=1 // pred_check
      _
    $region23: #{tpu_custom_call.1} parent=1 // pred_check_branch
      %165 = sbr.rel (0) target = $region25
    $region24: #{tpu_custom_call.1} parent=1 // pred_region
      %s167 = ssub.s32 512, 512
      %168 = vsyncadd [#allocation4], %s167
      %s169 = sshll.u32 [#allocation7], 4
      %s170 = int_to_ptr.vmem [resolvable:$true] %s169
      %175 = dma.vmem_to_hbm [thread:$0]  %s170, 512, %s3, [#allocation4], 128, 128, 8
    $region25: #{tpu_custom_call.1} parent=1 // pred_fallthru
      _
    // Predicated region
    $region26: #{tpu_custom_call.1} parent=1 // pred_check
      _
    $region27: #{tpu_custom_call.1} parent=1 // pred_check_branch
      %177 = sbr.rel (0) target = $region29
    $region28: #{tpu_custom_call.1} parent=1 // pred_region
      %178 = dma.done [#allocation4], 512
    $region29: #{tpu_custom_call.1} parent=1 // pred_fallthru
      _
    %179 = vsyncpa [#allocation3], 1
    %180 = vsyncpa [#allocation6], 1
    %181 = vsyncpa [#allocation4], 1

</llo_original>
